<compile_context>
chip_gen: v7x
topology: tpu7x:2x2x1
jax: 0.10.0
libtpu: 0.0.40
codegen_flags: <defaults>
</compile_context>

<pallas_src>
import functools

import jax
import jax.numpy as jnp
from jax import lax
from jax.experimental import pallas as pl
from jax.experimental.pallas import tpu as pltpu


_PAD_SENTINEL = 1e30          # squared-norm sentinel for padded rows
_EXP_ARG_FLOOR = -1.0e4       # exp() of this underflows to exactly 0 in f32


def _round_up(x: int, m: int) -> int:
    return (x + m - 1) // m * m


def _ladder_exponents(alphas):
    """If alphas form a /2^k ladder under max(alphas) (e.g. (0.5, 1, 2)),
    return (sorted integer exponents, alpha_max) so kernel_u = e**p_u with
    e = exp(-d2 / (2 * alpha_max * mean_d2)); else None (generic path)."""
    amax = max(alphas)
    exps = []
    for a in alphas:
        r = amax / a
        p = int(round(r))
        if p < 1 or abs(r - p) > 1e-9 or (p & (p - 1)) != 0:
            return None
        exps.append(p)
    return tuple(sorted(exps)), amax


def _choose_tile(B, Dp, itemsize, tile_cap, budget_bytes=10 << 20):
    """Square tile T (multiple of 16) and tiles-per-half so that 2 feature
    blocks x double buffering stay within the VMEM budget and tiles never
    straddle the source/target boundary (Bp = T * n_half)."""
    t_mem = budget_bytes // (4 * Dp * itemsize)
    t_cap = max(16, min(int(tile_cap), (t_mem // 16) * 16))
    n_half = -(-B // t_cap)                      # ceil
    T = _round_up(-(-B // n_half), 16)
    return T, n_half


# ---------------------------------------------------------------------------
# Pallas kernel: one (row-tile, col-tile) block of pairwise distances,
# Gaussian kernels and the weighted reduction.  Upper-triangle tiles only
# (symmetry), per-row-tile partial sums accumulated across the j axis.
# ---------------------------------------------------------------------------
def _mkmmd_tile_kernel(scale_ref, xr_ref, xc_ref, sqr_ref, sqc_ref, out_ref, *,
                       alphas, batch_size, tile, tiles_per_half, linear):
    i = pl.program_id(0)
    j = pl.program_id(1)
    B = batch_size

    @pl.when(j == 0)
    def _init():
        out_ref[...] = jnp.zeros_like(out_ref)

    @pl.when(j >= i)                       # symmetry: upper triangle only
    def _compute():
        neg_half_inv_md = scale_ref[0, 0]  # -0.5 / mean(d2), precomputed

        xr = xr_ref[...]                   # (T, Dp) f32 or bf16
        xc = xc_ref[...]                   # (T, Dp)
        sq_r = sqr_ref[...]                # (T, 1) f32 (hoisted; pad=sentinel)
        sq_c = sqc_ref[...].T              # (1, T)  tiny sublane->lane xpose

        # Pairwise squared distances via gram.  dot_general contracts dim 1
        # of both operands (A @ B^T feed) -> MXU, f32 accumulate.
        gram = lax.dot_general(xr, xc, (((1,), (1,)), ((), ())),
                               preferred_element_type=jnp.float32)
        d2 = jnp.maximum(sq_r + sq_c - 2.0 * gram, 0.0)       # (T, T)

        # Gaussian kernels, summed before the (single) reduction.
        # Padded rows/cols have sentinel sq -> exp argument clamped to a huge
        # negative value -> kernel value exactly 0 (no masking needed).
        ladder = _ladder_exponents(alphas)
        if ladder is not None:
            exps, amax = ladder
            arg = jnp.maximum(d2 * (neg_half_inv_md * (1.0 / amax)),
                              _EXP_ARG_FLOOR)
            e = jnp.exp(arg)               # single EUP pass for the ladder
            ksum = None
            cur, cur_p = e, 1
            for p in exps:
                while cur_p < p:
                    cur = cur * cur        # VPU squarings: e^2, e^4, ...
                    cur_p *= 2
                ksum = cur if ksum is None else ksum + cur
        else:
            ksum = None
            for a in alphas:
                arg = jnp.maximum(d2 * (neg_half_inv_md * (1.0 / a)),
                                  _EXP_ARG_FLOOR)
                term = jnp.exp(arg)
                ksum = term if ksum is None else ksum + term

        if linear:
            # Linear DAN index matrix is sparse/asymmetric: build the
            # symmetrized (w + w^T)/2 per tile from iota (rare path).
            Bp = tiles_per_half * tile
            r = i * tile + lax.broadcasted_iota(jnp.int32, (tile, tile), 0)
            c = j * tile + lax.broadcasted_iota(jnp.int32, (tile, tile), 1)
            r_src = r < Bp
            c_src = c < Bp
            ro = jnp.where(r_src, r, r - Bp)
            co = jnp.where(c_src, c, c - Bp)
            ro_n = jnp.where(ro == B - 1, 0, ro + 1)
            co_n = jnp.where(co == B - 1, 0, co + 1)
            ro_p = jnp.where(ro == 0, B - 1, ro - 1)
            co_p = jnp.where(co == 0, B - 1, co - 1)
            same = r_src == c_src
            not_r_src = jnp.logical_not(r_src)
            not_c_src = jnp.logical_not(c_src)
            wf = jnp.where(same & (co == ro_n), 1.0,
                           jnp.where(r_src & not_c_src &
                                     ((co == ro_n) | (co == ro_p)),
                                     -1.0, 0.0))
            wt = jnp.where(same & (ro == co_n), 1.0,
                           jnp.where(c_src & not_r_src &
                                     ((ro == co_n) | (ro == co_p)),
                                     -1.0, 0.0))
            w_eff = (0.5 / B) * (wf + wt)
            tsum = jnp.sum(ksum * w_eff)
        else:
            # Default index matrix: constant per half-aligned tile -> scalar
            # weight on the scalar unit + a single cross-lane reduction.
            # (Diagonal removed analytically in the wrapper constant.)
            w_within = 1.0 / (B * (B - 1))
            w_cross = -1.0 / (B * B)
            same_half = (i < tiles_per_half) == (j < tiles_per_half)
            w = jnp.where(same_half, w_within, w_cross)
            tsum = w * jnp.sum(ksum)

        factor = jnp.where(j > i, 2.0, 1.0)        # off-diagonal tiles x2
        out_ref[...] = out_ref[...] + (factor * tsum).astype(jnp.float32)


# ---------------------------------------------------------------------------
# Wrapper.
# ---------------------------------------------------------------------------
def mk_mmd(z_s: jnp.ndarray,
           z_t: jnp.ndarray,
           alphas=(0.5, 1.0, 2.0),
           linear: bool = False,
           tile_cap: int = 512) -> jnp.ndarray:
    """MK-MMD loss between source/target activations. Returns a scalar."""
    assert z_s.shape == z_t.shape
    B = int(z_s.shape[0])
    assert B >= 2, "MK-MMD requires batch_size >= 2 (reference divides by B-1)"
    zs = z_s.reshape(B, -1)
    zt = z_t.reshape(B, -1)
    D = int(zs.shape[1])

    feats32 = jnp.concatenate([zs, zt], axis=0).astype(jnp.float32)   # (2B, D)
    # Centering is translation-invariant for d2 and makes the closed-form
    # mean distance (and the gram cancellation) numerically stable.
    feats32 = feats32 - jnp.mean(feats32, axis=0, keepdims=True)

    # Keep bf16 activations bf16 for the MXU gram (f32 accumulate);
    # everything else in f32.
    mxu_dtype = jnp.bfloat16 if z_s.dtype == jnp.bfloat16 else jnp.float32
    feats_mxu = feats32.astype(mxu_dtype)
    feats_sq = feats_mxu.astype(jnp.float32)   # sq consistent with MXU inputs

    sq = jnp.sum(feats_sq * feats_sq, axis=1)                 # (2B,) f32
    # mean_ij ||x_i - x_j||^2 over ALL N^2 pairs == 2 * mean_i ||x_i - mu||^2
    mean_d2 = 2.0 * jnp.mean(sq)
    neg_half_inv_md = (-0.5 / mean_d2).reshape(1, 1).astype(jnp.float32)

    Dp = _round_up(D, 128)
    T, n_half = _choose_tile(B, Dp, jnp.dtype(mxu_dtype).itemsize, tile_cap)
    Bp = T * n_half
    n_tiles = 2 * n_half

    pad_r = Bp - B
    pad_c = Dp - D
    # Pad each half separately so tiles never straddle the S/T boundary.
    fs = jnp.pad(feats_mxu[:B], ((0, pad_r), (0, pad_c)))
    ft = jnp.pad(feats_mxu[B:], ((0, pad_r), (0, pad_c)))
    feats_p = jnp.concatenate([fs, ft], axis=0)               # (2Bp, Dp)

    # Padded rows get a huge squared norm -> their kernel values are exactly
    # 0 in the kernel (no per-element masking required).
    sq_s = jnp.pad(sq[:B], (0, pad_r), constant_values=_PAD_SENTINEL)
    sq_t = jnp.pad(sq[B:], (0, pad_r), constant_values=_PAD_SENTINEL)
    sq_p = jnp.concatenate([sq_s, sq_t]).reshape(2 * Bp, 1).astype(jnp.float32)

    kernel = functools.partial(
        _mkmmd_tile_kernel,
        alphas=tuple(float(a) for a in alphas),
        batch_size=B, tile=T, tiles_per_half=n_half, linear=bool(linear))

    out = pl.pallas_call(
        kernel,
        out_shape=jax.ShapeDtypeStruct((n_tiles, 8, 128), jnp.float32),
        grid=(n_tiles, n_tiles),
        in_specs=[
            pl.BlockSpec(memory_space=pltpu.SMEM),             # -0.5/mean_d2
            pl.BlockSpec((T, Dp), lambda i, j: (i, 0)),        # row features
            pl.BlockSpec((T, Dp), lambda i, j: (j, 0)),        # col features
            pl.BlockSpec((T, 1), lambda i, j: (i, 0)),         # row sq norms
            pl.BlockSpec((T, 1), lambda i, j: (j, 0)),         # col sq norms
        ],
        # Per-row-tile partial sums, accumulated across the j ("arbitrary")
        # axis; the i axis is "parallel" (megacore on v7x).
        out_specs=pl.BlockSpec((1, 8, 128), lambda i, j: (i, 0, 0)),
        compiler_params=pltpu.CompilerParams(
            dimension_semantics=("parallel", "arbitrary"),
            vmem_limit_bytes=32 * 1024 * 1024),
    )(neg_half_inv_md, feats_p, feats_p, sq_p, sq_p)

    num_k = len(alphas)
    if linear:
        const = 2.0 / (B - 1)
    else:
        # +2/(B-1) from the reference, minus the analytic removal of the
        # diagonal (kernel value == num_k there, weight w_within), which the
        # constant per-tile weights otherwise include:
        #   num_k * 2B * (1/(B(B-1))) = 2*num_k/(B-1)
        const = (2.0 - 2.0 * num_k) / (B - 1)
    return jnp.sum(out[:, 0, 0]) + jnp.float32(const)


# ---------------------------------------------------------------------------
# Pure-JAX reference (same math as the PyTorch module, no Pallas).
# ---------------------------------------------------------------------------
def _build_index_matrix(batch_size: int, linear: bool) -> jnp.ndarray:
    B = batch_size
    if linear:
        m = jnp.zeros((2 * B, 2 * B), jnp.float32)
        for i in range(B):
            s1, s2 = i, (i + 1) % B
            t1, t2 = s1 + B, s2 + B
            m = m.at[s1, s2].set(1.0 / B)
            m = m.at[t1, t2].set(1.0 / B)
            m = m.at[s1, t2].set(-1.0 / B)
            m = m.at[s2, t1].set(-1.0 / B)
        return m
    eye = jnp.eye(B, dtype=jnp.float32)
    within = (1.0 / (B * (B - 1))) * (jnp.ones((B, B), jnp.float32) - eye)
    cross = (-1.0 / (B * B)) * jnp.ones((B, B), jnp.float32)
    top = jnp.concatenate([within, cross], axis=1)
    bot = jnp.concatenate([cross, within], axis=1)
    return jnp.concatenate([top, bot], axis=0)


def _mk_mmd_ref(z_s, z_t, alphas=(0.5, 1.0, 2.0), linear=False):
    B = z_s.shape[0]
    x = jnp.concatenate([z_s.reshape(B, -1), z_t.reshape(B, -1)],
                        axis=0).astype(jnp.float32)
    d2 = jnp.sum((x[:, None, :] - x[None, :, :]) ** 2, axis=-1)
    mean_d2 = jnp.mean(d2)
    km = sum(jnp.exp(-d2 / (2.0 * a * mean_d2)) for a in alphas)
    idx = _build_index_matrix(B, linear)
    return jnp.sum(km * idx) + 2.0 / (B - 1)


if __name__ == "__main__":
    key = jax.random.PRNGKey(0)
    k1, k2, k3, k4 = jax.random.split(key, 4)

    # Small activation-like inputs: batch=8, feature dim 32.
    B, D = 8, 32
    z_s = jax.random.normal(k1, (B, D), jnp.float32)
    z_t = jax.random.normal(k2, (B, D), jnp.float32)

    # 1) default alphas (power-of-two ladder -> single EUP exp pass)
    loss = jax.block_until_ready(mk_mmd(z_s, z_t))
    ref = _mk_mmd_ref(z_s, z_t)
    assert jnp.allclose(loss, ref, atol=5e-4, rtol=5e-4), (float(loss), float(ref))

    # 2) non-ladder alphas (generic multi-exp fallback)
    loss2 = jax.block_until_ready(mk_mmd(z_s, z_t, alphas=(0.75, 1.5, 2.5)))
    ref2 = _mk_mmd_ref(z_s, z_t, alphas=(0.75, 1.5, 2.5))
    assert jnp.allclose(loss2, ref2, atol=5e-4, rtol=5e-4), (float(loss2), float(ref2))

    # 3) linear DAN variant (iota weight path, symmetry-folded)
    loss3 = jax.block_until_ready(mk_mmd(z_s, z_t, linear=True))
    ref3 = _mk_mmd_ref(z_s, z_t, linear=True)
    assert jnp.allclose(loss3, ref3, atol=5e-4, rtol=5e-4), (float(loss3), float(ref3))

    # 4) multi-tile-per-half path with (minibatch, *) activations: tile_cap
    #    forces 3 tiles per half, exercising sentinel-masked padding, the
    #    per-tile scalar weights and the x2 off-diagonal symmetry factor.
    B2 = 40
    z_s2 = jax.random.normal(k3, (B2, 2, 4, 4), jnp.float32)
    z_t2 = jax.random.normal(k4, (B2, 2, 4, 4), jnp.float32)
    loss4 = jax.block_until_ready(mk_mmd(z_s2, z_t2, tile_cap=16))
    ref4 = _mk_mmd_ref(z_s2, z_t2)
    assert jnp.allclose(loss4, ref4, atol=5e-4, rtol=5e-4), (float(loss4), float(ref4))

    print("KERNEL_OK")
</pallas_src>

<mosaic_0001>
module attributes {stable_mosaic.version = 11 : i64} {
  func.func @_mkmmd_tile_kernel(%arg0: i32, %arg1: i32, %arg2: memref<1x1xf32, #tpu.memory_space<smem>>, %arg3: memref<16x128xf32, #tpu.memory_space<vmem>>, %arg4: memref<16x128xf32, #tpu.memory_space<vmem>>, %arg5: memref<16x1xf32, #tpu.memory_space<vmem>>, %arg6: memref<16x1xf32, #tpu.memory_space<vmem>>, %arg7: memref<1x8x128xf32, #tpu.memory_space<vmem>>) attributes {dimension_semantics = [#tpu.dimension_semantics<parallel>, #tpu.dimension_semantics<arbitrary>], iteration_bounds = array<i64: 2, 2>, scalar_prefetch = 0 : i64, scratch_operands = 0 : i64, tpu.core_type = #tpu.core_type<tc>, window_params = [{transform_indices = @transform_0, window_bounds = array<i64: 1, 1>}, {transform_indices = @transform_1, window_bounds = array<i64: 16, 128>}, {transform_indices = @transform_2, window_bounds = array<i64: 16, 128>}, {transform_indices = @transform_3, window_bounds = array<i64: 16, 1>}, {transform_indices = @transform_4, window_bounds = array<i64: 16, 1>}, {transform_indices = @transform_5, window_bounds = array<i64: 1, 8, 128>}]} {
    %c0_i32 = arith.constant 0 : i32
    %0 = arith.cmpi eq, %arg1, %c0_i32 : i32
    %1 = arith.extui %0 : i1 to i32
    %c0_i32_0 = arith.constant 0 : i32
    %2 = arith.cmpi ne, %1, %c0_i32_0 : i32
    scf.if %2 {
      %cst = arith.constant 0.000000e+00 : f32
      %6 = vector.broadcast %cst : f32 to vector<1x8x128xf32>
      %c0 = arith.constant 0 : index
      %c0_2 = arith.constant 0 : index
      %c0_3 = arith.constant 0 : index
      %7 = vector.load %arg7[%c0, %c0_2, %c0_3] : memref<1x8x128xf32, #tpu.memory_space<vmem>>, vector<1x8x128xf32>
      tpu.vector_store %arg7[%c0, %c0_2, %c0_3], %6 {strides = array<i32>} : memref<1x8x128xf32, #tpu.memory_space<vmem>>, vector<1x8x128xf32>,
    } else {
    }
    %3 = arith.cmpi sge, %arg1, %arg0 : i32
    %4 = arith.extui %3 : i1 to i32
    %c0_i32_1 = arith.constant 0 : i32
    %5 = arith.cmpi ne, %4, %c0_i32_1 : i32
    scf.if %5 {
      %c0 = arith.constant 0 : index
      %c0_2 = arith.constant 0 : index
      %6 = memref.load %arg2[%c0, %c0_2] : memref<1x1xf32, #tpu.memory_space<smem>>
      %c0_3 = arith.constant 0 : index
      %c0_4 = arith.constant 0 : index
      %7 = vector.load %arg3[%c0_3, %c0_4] : memref<16x128xf32, #tpu.memory_space<vmem>>, vector<16x128xf32>
      %c0_5 = arith.constant 0 : index
      %c0_6 = arith.constant 0 : index
      %8 = vector.load %arg4[%c0_5, %c0_6] : memref<16x128xf32, #tpu.memory_space<vmem>>, vector<16x128xf32>
      %c0_7 = arith.constant 0 : index
      %c0_8 = arith.constant 0 : index
      %9 = vector.load %arg5[%c0_7, %c0_8] : memref<16x1xf32, #tpu.memory_space<vmem>>, vector<16x1xf32>
      %c0_9 = arith.constant 0 : index
      %c0_10 = arith.constant 0 : index
      %10 = vector.load %arg6[%c0_9, %c0_10] : memref<16x1xf32, #tpu.memory_space<vmem>>, vector<16x1xf32>
      %11 = tpu.transpose %10, [1, 0] : vector<16x1xf32> -> vector<1x16xf32>
      %cst = arith.constant dense<0.000000e+00> : vector<16x16xf32>
      %12 = tpu.matmul %7, %8, %cst {dimension_numbers = #tpu.dot_dimension_numbers<[1], [1], [0], [0], [0, 0, 1, 0], [], []>} : vector<16x128xf32>, vector<16x128xf32>, vector<16x16xf32> -> vector<16x16xf32>
      %13 = vector.broadcast %9 : vector<16x1xf32> to vector<16x16xf32>
      %14 = vector.broadcast %11 : vector<1x16xf32> to vector<16x16xf32>
      %15 = arith.addf %13, %14 : vector<16x16xf32>
      %cst_11 = arith.constant 2.000000e+00 : f32
      %16 = vector.broadcast %cst_11 : f32 to vector<16x16xf32>
      %17 = arith.mulf %16, %12 : vector<16x16xf32>
      %18 = arith.subf %15, %17 : vector<16x16xf32>
      %cst_12 = arith.constant 0.000000e+00 : f32
      %19 = vector.broadcast %cst_12 : f32 to vector<16x16xf32>
      %20 = arith.maximumf %18, %19 : vector<16x16xf32>
      %cst_13 = arith.constant 5.000000e-01 : f32
      %21 = arith.mulf %6, %cst_13 : f32
      %22 = vector.broadcast %21 : f32 to vector<16x16xf32>
      %23 = arith.mulf %20, %22 : vector<16x16xf32>
      %cst_14 = arith.constant -1.000000e+04 : f32
      %24 = vector.broadcast %cst_14 : f32 to vector<16x16xf32>
      %25 = arith.maximumf %23, %24 : vector<16x16xf32>
      %26 = math.exp %25 : vector<16x16xf32>
      %27 = arith.mulf %26, %26 : vector<16x16xf32>
      %28 = arith.addf %26, %27 : vector<16x16xf32>
      %29 = arith.mulf %27, %27 : vector<16x16xf32>
      %30 = arith.addf %28, %29 : vector<16x16xf32>
      %c1_i32 = arith.constant 1 : i32
      %31 = arith.cmpi slt, %arg0, %c1_i32 : i32
      %c1_i32_15 = arith.constant 1 : i32
      %32 = arith.cmpi slt, %arg1, %c1_i32_15 : i32
      %33 = arith.xori %31, %32 : i1
      %true = arith.constant true
      %34 = arith.xori %33, %true : i1
      %cst_16 = arith.constant 0.0178571437 : f32
      %cst_17 = arith.constant -1.562500e-02 : f32
      %35 = arith.select %34, %cst_16, %cst_17 : f32
      %36 = vector.shape_cast %30 : vector<16x16xf32> to vector<1x16x16xf32>
      %cst_18 = arith.constant dense<0.000000e+00> : vector<1xf32>
      %37 = vector.multi_reduction <add>, %36, %cst_18 [1, 2] : vector<1x16x16xf32> to vector<1xf32>
      %38 = vector.shape_cast %37 : vector<1xf32> to vector<1x1x1xf32>
      %39 = vector.extract %38[0, 0, 0] : f32 from vector<1x1x1xf32>
      %40 = arith.mulf %35, %39 : f32
      %41 = arith.cmpi sgt, %arg1, %arg0 : i32
      %cst_19 = arith.constant 2.000000e+00 : f32
      %cst_20 = arith.constant 1.000000e+00 : f32
      %42 = arith.select %41, %cst_19, %cst_20 : f32
      %c0_21 = arith.constant 0 : index
      %c0_22 = arith.constant 0 : index
      %c0_23 = arith.constant 0 : index
      %43 = vector.load %arg7[%c0_21, %c0_22, %c0_23] : memref<1x8x128xf32, #tpu.memory_space<vmem>>, vector<1x8x128xf32>
      %44 = arith.mulf %42, %40 : f32
      %45 = vector.broadcast %44 : f32 to vector<1x8x128xf32>
      %46 = arith.addf %43, %45 : vector<1x8x128xf32>
      %c0_24 = arith.constant 0 : index
      %c0_25 = arith.constant 0 : index
      %c0_26 = arith.constant 0 : index
      %47 = vector.load %arg7[%c0_24, %c0_25, %c0_26] : memref<1x8x128xf32, #tpu.memory_space<vmem>>, vector<1x8x128xf32>
      tpu.vector_store %arg7[%c0_24, %c0_25, %c0_26], %46 {strides = array<i32>} : memref<1x8x128xf32, #tpu.memory_space<vmem>>, vector<1x8x128xf32>,
    } else {
    }
    return
  }
  func.func @transform_0(%arg0: i32, %arg1: i32) -> (i32, i32) {
    %c0_i32 = arith.constant 0 : i32
    %c0_i32_0 = arith.constant 0 : i32
    %c0_i32_1 = arith.constant 0 : i32
    return %c0_i32, %c0_i32_0 : i32, i32
  }
  func.func @transform_1(%arg0: i32, %arg1: i32) -> (i32, i32) {
    %c0_i32 = arith.constant 0 : i32
    %c0_i32_0 = arith.constant 0 : i32
    return %arg0, %c0_i32 : i32, i32
  }
  func.func @transform_2(%arg0: i32, %arg1: i32) -> (i32, i32) {
    %c0_i32 = arith.constant 0 : i32
    %c0_i32_0 = arith.constant 0 : i32
    return %arg1, %c0_i32 : i32, i32
  }
  func.func @transform_3(%arg0: i32, %arg1: i32) -> (i32, i32) {
    %c0_i32 = arith.constant 0 : i32
    %c0_i32_0 = arith.constant 0 : i32
    return %arg0, %c0_i32 : i32, i32
  }
  func.func @transform_4(%arg0: i32, %arg1: i32) -> (i32, i32) {
    %c0_i32 = arith.constant 0 : i32
    %c0_i32_0 = arith.constant 0 : i32
    return %arg1, %c0_i32 : i32, i32
  }
  func.func @transform_5(%arg0: i32, %arg1: i32) -> (i32, i32, i32) {
    %c0_i32 = arith.constant 0 : i32
    %c0_i32_0 = arith.constant 0 : i32
    %c0_i32_1 = arith.constant 0 : i32
    return %arg0, %c0_i32, %c0_i32_0 : i32, i32, i32
  }
}

</mosaic_0001>

<llo_original>
// kernel: tpu_custom_call.1
$region0: #{tpu_custom_call.1}
  #allocation0 [shape = 'u32[]', space=smem, size = 0x4, offset = 0x4, fixed_abs, tag = 'smem constant byte address 0x4 - core index']
  #allocation1 [shape = 'u32[144,128]{1,0:T(1,128)}', space=vmem, size = 0x12000, scoped, tag = 'internal scratch']
  #allocation2 [shape = 'f32[1,1]{1,0:T(1,128)S(6)}', space=smem, size = 0x200, scoped, tag = 'scoped memory for tpu_custom_call.1']
  %s0 = inlined_call_operand.<no memory space> [shape: f32[1,1], index: 0, kind: input, shape index: {}]
  %s1 = inlined_call_operand.vmem [shape: f32[32,128], index: 1, kind: input, shape index: {}]
  %s2 = inlined_call_operand.vmem [shape: f32[32,128], index: 2, kind: input, shape index: {}]
  %s3 = inlined_call_operand.vmem [shape: f32[32,1], index: 3, kind: input, shape index: {}]
  %s4 = inlined_call_operand.vmem [shape: f32[32,1], index: 4, kind: input, shape index: {}]
  %s5 = inlined_call_operand.hbm [shape: f32[2,8,128], index: 5, kind: output, shape index: {}]
  %s6 = sld [smem:[#allocation0]]
  $region61: #{tpu_custom_call.1} parent=0
    _
  %s8 = ssub.s32 1, %s6
  %s9 = scalar_select 0, %s8, %s6
  %10 = sst [smem:[#allocation2]] %s0
  $region1: #{tpu_custom_call.1} parent=0
    #allocation3 [shape = 'u8[8192]{0}', space=vmem, size = 0x2000, scoped, tag = 'output window, operand 0']
    #allocation4 [shape = 's32[2]{0}', space=sflag, size = 0x8, scoped, tag = 'scoped memory for tpu_custom_call.1']
    %11 = vsyncpa [#allocation4], 0
    %s12 = scalar_lea.sflag [#allocation4], 1
    %13 = vsyncpa %s12, 0
    loop: start=0, step=1, limit=6
    $region2: #{tpu_custom_call.1} parent=1 // loop_pre_header
      _
    $region3: #{tpu_custom_call.1} parent=1 // loop_header
      %s15 = sphi 0, %s19
      %p16 = scmp.ge.s32.totalorder %s15, 6
      %s22 = sphi 0, %s34
      %s23 = sphi 0, %s30
      %s24 = sphi 0, %s22
      %s25 = sphi 0, %s23
      %s26 = sphi 0, %s24
      %s27 = sphi 0, %s25
      %s35 = sphi 0, %s35
      %s37 = sphi 0, %s35
      %s38 = sphi 0, %s37
      %s52 = sphi 0, %s38
      %s58 = sphi 0, %s60
      %s61 = sphi 0, %s58
      %s62 = sphi 0, %s61
      %s78 = sphi 0, %s62
      %s84 = sphi 0, %s86
      %s87 = sphi 0, %s84
      %s88 = sphi 0, %s87
      %s104 = sphi 0, %s88
      %s110 = sphi 0, %s112
      %s113 = sphi 0, %s110
      %s114 = sphi 0, %s113
      %s130 = sphi 0, %s114
      %s136 = sphi 0, %s138
      %s139 = sphi 0, %s136
      %s140 = sphi 0, %s139
      %s156 = sphi 0, %s140
      %s162 = sphi 0, %s164
      %s165 = sphi 0, %s162
      %s166 = sphi 0, %s165
      %s182 = sphi 0, %s166
    $region4: #{tpu_custom_call.1} parent=1 // loop_header_branch
      %18 = sbr.rel (%p16) target = $region8
    $region5: #{tpu_custom_call.1} parent=1 // loop_body
      %s20 = ssub.s32 %s15, 1
      %s21 = ssub.s32 %s15, 2
      %s28 = sadd.s32 1, %s23
      %p29 = scmp.ge.s32.totalorder %s28, 2
      %s30 = scalar_select %p29, 0, %s28
      %s31 = sadd.s32 1, %s22
      %s32 = scalar_select %p29, %s31, %s22
      %p33 = scmp.ge.s32.totalorder %s32, 2
      %s34 = scalar_select %p33, 0, %s32
      %s36 = sadd.s32 %s35, 1
      %p39 = scmp.eq.s32.totalorder %s15, 3
      %p40 = scmp.ne.s32.totalorder %s35, %s37
      %p41 = scmp.eq.s32.totalorder %s15, 0
      %p42 = por %p40, %p41
      %p43 = scmp.ne.s32.totalorder %s35, %s37
      %p44 = scmp.eq.s32.totalorder %s20, 3
      %p45 = por %p43, %p44
      %p46 = scmp.ne.s32.totalorder %s37, %s38
      %p47 = scmp.eq.s32.totalorder %s20, 0
      %p48 = por %p46, %p47
      %p49 = scmp.ne.s32.totalorder %s37, %s38
      %p50 = scmp.eq.s32.totalorder %s21, 3
      %p51 = por %p49, %p50
      %p53 = scmp.ne.s32.totalorder %s38, %s52
      %p54 = scmp.eq.s32.totalorder %s21, 0
      %p55 = por %p53, %p54
      %s56 = ssub.s32 %s22, %s34
      %p57 = scmp.eq.s32.totalorder %s56, 0
      %s59 = sadd.s32 %s58, 1
      %s60 = scalar_select %p57, %s58, %s59
      %p63 = pneg %p57
      %p64 = scmp.eq.s32.totalorder %s15, 3
      %p65 = por %p63, %p64
      %p66 = scmp.ne.s32.totalorder %s58, %s61
      %p67 = scmp.eq.s32.totalorder %s15, 0
      %p68 = por %p66, %p67
      %p69 = scmp.ne.s32.totalorder %s58, %s61
      %p70 = scmp.eq.s32.totalorder %s20, 3
      %p71 = por %p69, %p70
      %p72 = scmp.ne.s32.totalorder %s61, %s62
      %p73 = scmp.eq.s32.totalorder %s20, 0
      %p74 = por %p72, %p73
      %p75 = scmp.ne.s32.totalorder %s61, %s62
      %p76 = scmp.eq.s32.totalorder %s21, 3
      %p77 = por %p75, %p76
      %p79 = scmp.ne.s32.totalorder %s62, %s78
      %p80 = scmp.eq.s32.totalorder %s21, 0
      %p81 = por %p79, %p80
      %s82 = ssub.s32 %s23, %s30
      %p83 = scmp.eq.s32.totalorder %s82, 0
      %s85 = sadd.s32 %s84, 1
      %s86 = scalar_select %p83, %s84, %s85
      %p89 = pneg %p83
      %p90 = scmp.eq.s32.totalorder %s15, 3
      %p91 = por %p89, %p90
      %p92 = scmp.ne.s32.totalorder %s84, %s87
      %p93 = scmp.eq.s32.totalorder %s15, 0
      %p94 = por %p92, %p93
      %p95 = scmp.ne.s32.totalorder %s84, %s87
      %p96 = scmp.eq.s32.totalorder %s20, 3
      %p97 = por %p95, %p96
      %p98 = scmp.ne.s32.totalorder %s87, %s88
      %p99 = scmp.eq.s32.totalorder %s20, 0
      %p100 = por %p98, %p99
      %p101 = scmp.ne.s32.totalorder %s87, %s88
      %p102 = scmp.eq.s32.totalorder %s21, 3
      %p103 = por %p101, %p102
      %p105 = scmp.ne.s32.totalorder %s88, %s104
      %p106 = scmp.eq.s32.totalorder %s21, 0
      %p107 = por %p105, %p106
      %s108 = ssub.s32 %s22, %s34
      %p109 = scmp.eq.s32.totalorder %s108, 0
      %s111 = sadd.s32 %s110, 1
      %s112 = scalar_select %p109, %s110, %s111
      %p115 = pneg %p109
      %p116 = scmp.eq.s32.totalorder %s15, 3
      %p117 = por %p115, %p116
      %p118 = scmp.ne.s32.totalorder %s110, %s113
      %p119 = scmp.eq.s32.totalorder %s15, 0
      %p120 = por %p118, %p119
      %p121 = scmp.ne.s32.totalorder %s110, %s113
      %p122 = scmp.eq.s32.totalorder %s20, 3
      %p123 = por %p121, %p122
      %p124 = scmp.ne.s32.totalorder %s113, %s114
      %p125 = scmp.eq.s32.totalorder %s20, 0
      %p126 = por %p124, %p125
      %p127 = scmp.ne.s32.totalorder %s113, %s114
      %p128 = scmp.eq.s32.totalorder %s21, 3
      %p129 = por %p127, %p128
      %p131 = scmp.ne.s32.totalorder %s114, %s130
      %p132 = scmp.eq.s32.totalorder %s21, 0
      %p133 = por %p131, %p132
      %s134 = ssub.s32 %s23, %s30
      %p135 = scmp.eq.s32.totalorder %s134, 0
      %s137 = sadd.s32 %s136, 1
      %s138 = scalar_select %p135, %s136, %s137
      %p141 = pneg %p135
      %p142 = scmp.eq.s32.totalorder %s15, 3
      %p143 = por %p141, %p142
      %p144 = scmp.ne.s32.totalorder %s136, %s139
      %p145 = scmp.eq.s32.totalorder %s15, 0
      %p146 = por %p144, %p145
      %p147 = scmp.ne.s32.totalorder %s136, %s139
      %p148 = scmp.eq.s32.totalorder %s20, 3
      %p149 = por %p147, %p148
      %p150 = scmp.ne.s32.totalorder %s139, %s140
      %p151 = scmp.eq.s32.totalorder %s20, 0
      %p152 = por %p150, %p151
      %p153 = scmp.ne.s32.totalorder %s139, %s140
      %p154 = scmp.eq.s32.totalorder %s21, 3
      %p155 = por %p153, %p154
      %p157 = scmp.ne.s32.totalorder %s140, %s156
      %p158 = scmp.eq.s32.totalorder %s21, 0
      %p159 = por %p157, %p158
      %s160 = ssub.s32 %s22, %s34
      %p161 = scmp.eq.s32.totalorder %s160, 0
      %s163 = sadd.s32 %s162, 1
      %s164 = scalar_select %p161, %s162, %s163
      %p167 = pneg %p161
      %p168 = scmp.eq.s32.totalorder %s15, 3
      %p169 = por %p167, %p168
      %p170 = scmp.ne.s32.totalorder %s162, %s165
      %p171 = scmp.eq.s32.totalorder %s15, 0
      %p172 = por %p170, %p171
      %p173 = scmp.ne.s32.totalorder %s162, %s165
      %p174 = scmp.eq.s32.totalorder %s20, 3
      %p175 = por %p173, %p174
      %p176 = scmp.ne.s32.totalorder %s165, %s166
      %p177 = scmp.eq.s32.totalorder %s20, 0
      %p178 = por %p176, %p177
      %p179 = scmp.ne.s32.totalorder %s165, %s166
      %p180 = scmp.eq.s32.totalorder %s21, 3
      %p181 = por %p179, %p180
      %p183 = scmp.ne.s32.totalorder %s166, %s182
      %p184 = scmp.eq.s32.totalorder %s21, 0
      %p185 = por %p183, %p184
      %p186 = scmp.le.s32.totalorder 1, %s15
      %p187 = scmp.lt.s32.totalorder %s15, 5
      %p188 = pnand %p186, %p187
      %p189 = pneg %p188
      // Predicated region
      $region9: #{tpu_custom_call.1} parent=5 // pred_check
        _
      $region10: #{tpu_custom_call.1} parent=5 // pred_check_branch
        %191 = sbr.rel (%p188) target = $region12
      $region11: #{tpu_custom_call.1} parent=5 // pred_region
        %s192 = ssub.s32 %s15, 1
        // Predicated region
        $region13: #{tpu_custom_call.1} parent=11 // pred_check
          %p193 = pneg %p48
        $region14: #{tpu_custom_call.1} parent=11 // pred_check_branch
          %195 = sbr.rel (%p193) target = $region16
        $region15: #{tpu_custom_call.1} parent=11 // pred_region
          _
        $region16: #{tpu_custom_call.1} parent=11 // pred_fallthru
          _
      $region12: #{tpu_custom_call.1} parent=5 // pred_fallthru
        _
      %p196 = scmp.lt.s32.totalorder %s15, 4
      // Predicated region
      $region17: #{tpu_custom_call.1} parent=5 // pred_check
        %p197 = pneg %p196
      $region18: #{tpu_custom_call.1} parent=5 // pred_check_branch
        %199 = sbr.rel (%p197) target = $region20
      $region19: #{tpu_custom_call.1} parent=5 // pred_region
        // Predicated region
        $region21: #{tpu_custom_call.1} parent=19 // pred_check
          %p200 = pneg %p68
        $region22: #{tpu_custom_call.1} parent=19 // pred_check_branch
          %202 = sbr.rel (%p200) target = $region24
        $region23: #{tpu_custom_call.1} parent=19 // pred_region
          %s203 = smul.u32 2, %s22
          %p204 = scmp.lt.s32.totalorder %s203, 3
          %s205 = scalar_select %p204, %s203, 3
          %s206 = smul.addr %s205, 8
          %s207 = scalar_lea.vmem %s1, %s206
          %s208 = smul.u32 2, %s22
        $region24: #{tpu_custom_call.1} parent=19 // pred_fallthru
          _
        // Predicated region
        $region25: #{tpu_custom_call.1} parent=19 // pred_check
          %p209 = pneg %p94
        $region26: #{tpu_custom_call.1} parent=19 // pred_check_branch
          %211 = sbr.rel (%p209) target = $region28
        $region27: #{tpu_custom_call.1} parent=19 // pred_region
          %s212 = smul.u32 2, %s23
          %p213 = scmp.lt.s32.totalorder %s212, 3
          %s214 = scalar_select %p213, %s212, 3
          %s215 = smul.addr %s214, 8
          %s216 = scalar_lea.vmem %s2, %s215
          %s217 = smul.u32 2, %s23
        $region28: #{tpu_custom_call.1} parent=19 // pred_fallthru
          _
        // Predicated region
        $region29: #{tpu_custom_call.1} parent=19 // pred_check
          %p218 = pneg %p120
        $region30: #{tpu_custom_call.1} parent=19 // pred_check_branch
          %220 = sbr.rel (%p218) target = $region32
        $region31: #{tpu_custom_call.1} parent=19 // pred_region
          %s221 = smul.u32 2, %s22
          %p222 = scmp.lt.s32.totalorder %s221, 3
          %s223 = scalar_select %p222, %s221, 3
          %s224 = smul.addr %s223, 8
          %s225 = scalar_lea.vmem %s3, %s224
          %s226 = smul.u32 2, %s22
        $region32: #{tpu_custom_call.1} parent=19 // pred_fallthru
          _
        // Predicated region
        $region33: #{tpu_custom_call.1} parent=19 // pred_check
          %p227 = pneg %p146
        $region34: #{tpu_custom_call.1} parent=19 // pred_check_branch
          %229 = sbr.rel (%p227) target = $region36
        $region35: #{tpu_custom_call.1} parent=19 // pred_region
          %s230 = smul.u32 2, %s23
          %p231 = scmp.lt.s32.totalorder %s230, 3
          %s232 = scalar_select %p231, %s230, 3
          %s233 = smul.addr %s232, 8
          %s234 = scalar_lea.vmem %s4, %s233
          %s235 = smul.u32 2, %s23
        $region36: #{tpu_custom_call.1} parent=19 // pred_fallthru
          _
      $region20: #{tpu_custom_call.1} parent=5 // pred_fallthru
        _
      %p236 = scmp.le.s32.totalorder 1, %s15
      %p237 = scmp.lt.s32.totalorder %s15, 5
      %p238 = pnand %p236, %p237
      %p239 = pneg %p238
      // Predicated region
      $region37: #{tpu_custom_call.1} parent=5 // pred_check
        _
      $region38: #{tpu_custom_call.1} parent=5 // pred_check_branch
        %241 = sbr.rel (%p238) target = $region40
      $region39: #{tpu_custom_call.1} parent=5 // pred_region
        %s242 = ssub.s32 %s15, 1
        %p243 = pneg %p48
        %p244 = pneg %p45
        %s245 = smul.u32 2, %s24
        %p246 = scmp.lt.s32.totalorder %s245, 3
        %s247 = scalar_select %p246, %s245, 3
        %s248 = smul.addr %s247, 8
        %s249 = scalar_lea.vmem %s1, %s248
        %p250 = pneg %p74
        %p251 = pneg %p71
        %s252 = smul.u32 2, %s25
        %p253 = scmp.lt.s32.totalorder %s252, 3
        %s254 = scalar_select %p253, %s252, 3
        %s255 = smul.addr %s254, 8
        %s256 = scalar_lea.vmem %s2, %s255
        %p257 = pneg %p100
        %p258 = pneg %p97
        %s259 = smul.u32 2, %s24
        %p260 = scmp.lt.s32.totalorder %s259, 3
        %s261 = scalar_select %p260, %s259, 3
        %s262 = smul.addr %s261, 8
        %s263 = scalar_lea.vmem %s3, %s262
        %p264 = pneg %p126
        %p265 = pneg %p123
        %s266 = smul.u32 2, %s25
        %p267 = scmp.lt.s32.totalorder %s266, 3
        %s268 = scalar_select %p267, %s266, 3
        %s269 = smul.addr %s268, 8
        %s270 = scalar_lea.vmem %s4, %s269
        %p271 = pneg %p152
        %p272 = pneg %p149
        %p273 = pneg %p178
        %p274 = pneg %p175
        %s275 = sand.u32 %s165, 1
        %s276 = scalar_lea.sflag [#allocation4], %s275
        %s277 = sand.u32 %s165, 1
        %s278 = smul.addr %s277, 8
        %s279 = scalar_lea.vmem [#allocation3], %s278
        %s280 = smul.u32 2, %s24
        %p281 = scmp.lt.s32.totalorder %s280, 3
        %s282 = scalar_select %p281, %s280, 3
        %s283 = smul.addr %s282, 8
        %s284 = scalar_lea.vmem %s1, %s283
        %s285 = smul.u32 2, %s24
        %s286 = smul.u32 2, %s25
        %p287 = scmp.lt.s32.totalorder %s286, 3
        %s288 = scalar_select %p287, %s286, 3
        %s289 = smul.addr %s288, 8
        %s290 = scalar_lea.vmem %s2, %s289
        %s291 = smul.u32 2, %s25
        %s292 = smul.u32 2, %s24
        %p293 = scmp.lt.s32.totalorder %s292, 3
        %s294 = scalar_select %p293, %s292, 3
        %s295 = smul.addr %s294, 8
        %s296 = scalar_lea.vmem %s3, %s295
        %s297 = smul.u32 2, %s24
        %s298 = smul.u32 2, %s25
        %p299 = scmp.lt.s32.totalorder %s298, 3
        %s300 = scalar_select %p299, %s298, 3
        %s301 = smul.addr %s300, 8
        %s302 = scalar_lea.vmem %s4, %s301
        %s303 = smul.u32 2, %s25
        %p304 = scmp.eq.s32.totalorder %s25, 0
        // Predicated region
        $region41: #{tpu_custom_call.1} parent=39 // pred_check
          %p305 = pneg %p304
        $region42: #{tpu_custom_call.1} parent=39 // pred_check_branch
          %307 = sbr.rel (%p305) target = $region44
        $region43: #{tpu_custom_call.1} parent=39 // pred_region
          %308 = vst [vmem:[%s279] sm:$0xff] 0.0
        $region44: #{tpu_custom_call.1} parent=39 // pred_fallthru
          _
        %p309 = scmp.ge.s32.totalorder %s25, %s24
        // Predicated region
        $region45: #{tpu_custom_call.1} parent=39 // pred_check
          %p310 = pneg %p309
        $region46: #{tpu_custom_call.1} parent=39 // pred_check_branch
          %312 = sbr.rel (%p310) target = $region48
        $region47: #{tpu_custom_call.1} parent=39 // pred_region
          %s313 = sld [smem:[#allocation2]]
          %v314 = vld [vmem:[%s284] sm:$0xff]
          %v315 = vld [vmem:[%s284 + $0x8] sm:$0xff]
          %v316 = vld [vmem:[%s290] sm:$0xff]
          %v317 = vld [vmem:[%s290 + $0x8] sm:$0xff]
          %v318 = vld [vmem:[%s296] sm:$0xff]
          %v319 = vld [vmem:[%s296 + $0x8] sm:$0xff]
          %v320 = vld [vmem:[%s302] sm:$0xff]
          %v321 = vld [vmem:[%s302 + $0x8] sm:$0xff]
          %322 = vxpose.xlu0.b32.start [1/16] %v320, 128
          %323 = vxpose.xlu0.b32.cont [2/16] %v321, 128
          %324 = vxpose.xlu0.b32.cont [3/16] 0.0, 128
          %325 = vxpose.xlu0.b32.cont [4/16] 0.0, 128
          %326 = vxpose.xlu0.b32.cont [5/16] 0.0, 128
          %327 = vxpose.xlu0.b32.cont [6/16] 0.0, 128
          %328 = vxpose.xlu0.b32.cont [7/16] 0.0, 128
          %329 = vxpose.xlu0.b32.cont [8/16] 0.0, 128
          %330 = vxpose.xlu0.b32.cont [9/16] 0.0, 128
          %331 = vxpose.xlu0.b32.cont [10/16] 0.0, 128
          %332 = vxpose.xlu0.b32.cont [11/16] 0.0, 128
          %333 = vxpose.xlu0.b32.cont [12/16] 0.0, 128
          %334 = vxpose.xlu0.b32.cont [13/16] 0.0, 128
          %335 = vxpose.xlu0.b32.cont [14/16] 0.0, 128
          %336 = vxpose.xlu0.b32.cont [15/16] 0.0, 128
          %337 = vxpose.xlu0.b32.end [16/16] 0.0, 128
          %v338 = vpop.trf.xlu0
          %v339 = vpop.trf.xlu0
          %v340 = vpop.trf.xlu0
          %v341 = vpop.trf.xlu0
          %v342 = vpop.trf.xlu0
          %v343 = vpop.trf.xlu0
          %v344 = vpop.trf.xlu0
          %v345 = vpop.trf.xlu0
          %v346 = vpop.trf.xlu0
          %v347 = vpop.trf.xlu0
          %v348 = vpop.trf.xlu0
          %v349 = vpop.trf.xlu0
          %v350 = vpop.trf.xlu0
          %v351 = vpop.trf.xlu0
          %v352 = vpop.trf.xlu0
          %v353 = vpop.trf.xlu0
          %354 = vmatprep.subr.mxu0 0.0
          %355 = vmatpush1.xpose.msra.mxu0 %v316
          %356 = vmatprep.subr.mxu0 0.0
          %357 = vmatpush1.xpose.msra.mxu0 %v317
          %358 = vmatprep.subr.mxu0 0.0
          %359 = vmatpush1.xpose.msra.mxu0 0.0
          %360 = vmatprep.subr.mxu0 0.0
          %361 = vmatpush1.xpose.msra.mxu0 0.0
          %362 = vmatprep.subr.mxu0 0.0
          %363 = vmatpush1.xpose.msra.mxu0 0.0
          %364 = vmatprep.subr.mxu0 0.0
          %365 = vmatpush1.xpose.msra.mxu0 0.0
          %366 = vmatprep.subr.mxu0 0.0
          %367 = vmatpush1.xpose.msra.mxu0 0.0
          %368 = vmatprep.subr.mxu0 0.0
          %369 = vmatpush1.xpose.msra.mxu0 0.0
          %370 = vmatprep.subr.mxu0 0.0
          %371 = vmatpush1.xpose.msra.mxu0 0.0
          %372 = vmatprep.subr.mxu0 0.0
          %373 = vmatpush1.xpose.msra.mxu0 0.0
          %374 = vmatprep.subr.mxu0 0.0
          %375 = vmatpush1.xpose.msra.mxu0 0.0
          %376 = vmatprep.subr.mxu0 0.0
          %377 = vmatpush1.xpose.msra.mxu0 0.0
          %378 = vmatprep.subr.mxu0 0.0
          %379 = vmatpush1.xpose.msra.mxu0 0.0
          %380 = vmatprep.subr.mxu0 0.0
          %381 = vmatpush1.xpose.msra.mxu0 0.0
          %382 = vmatprep.subr.mxu0 0.0
          %383 = vmatpush1.xpose.msra.mxu0 0.0
          %384 = vmatprep.subr.mxu0 0.0
          %385 = vmatpush1.xpose.msra.mxu0 0.0
          %386 = vmatprep.subr.mxu0 0.0
          %387 = vmatpush1.xpose.msra.mxu0 0.0
          %388 = vmatprep.subr.mxu0 0.0
          %389 = vmatpush1.xpose.msra.mxu0 0.0
          %390 = vmatprep.subr.mxu0 0.0
          %391 = vmatpush1.xpose.msra.mxu0 0.0
          %392 = vmatprep.subr.mxu0 0.0
          %393 = vmatpush1.xpose.msra.mxu0 0.0
          %394 = vmatprep.subr.mxu0 0.0
          %395 = vmatpush1.xpose.msra.mxu0 0.0
          %396 = vmatprep.subr.mxu0 0.0
          %397 = vmatpush1.xpose.msra.mxu0 0.0
          %398 = vmatprep.subr.mxu0 0.0
          %399 = vmatpush1.xpose.msra.mxu0 0.0
          %400 = vmatprep.subr.mxu0 0.0
          %401 = vmatpush1.xpose.msra.mxu0 0.0
          %402 = vmatprep.subr.mxu0 0.0
          %403 = vmatpush1.xpose.msra.mxu0 0.0
          %404 = vmatprep.subr.mxu0 0.0
          %405 = vmatpush1.xpose.msra.mxu0 0.0
          %406 = vmatprep.subr.mxu0 0.0
          %407 = vmatpush1.xpose.msra.mxu0 0.0
          %408 = vmatprep.subr.mxu0 0.0
          %409 = vmatpush1.xpose.msra.mxu0 0.0
          %410 = vmatprep.subr.mxu0 0.0
          %411 = vmatpush1.xpose.msra.mxu0 0.0
          %412 = vmatprep.subr.mxu0 0.0
          %413 = vmatpush1.xpose.msra.mxu0 0.0
          %414 = vmatprep.subr.mxu0 0.0
          %415 = vmatpush1.xpose.msra.mxu0 0.0
          %416 = vmatprep.subr.mxu0 0.0
          %417 = vmatpush1.xpose.msra.mxu0 0.0
          %418 = vmatprep.mubr.f32.mxu0 0.0
          %419 = vmatmul.mubr.f32.gmra.mrb[0].mxu0 %v314
          %v420 = vpop.f32.mrb[0].mxu0
          %v421 = vadd.f32 0.0, %v420
          %v422 = vpop.f32.mrb[0].mxu0
          %423 = vmatprep.mubr.f32.mxu0 0.0
          %424 = vmatmul.mubr.f32.gmra.mrb[0].mxu0 %v315
          %v425 = vpop.f32.mrb[0].mxu0
          %v426 = vadd.f32 0.0, %v425
          %v427 = vpop.f32.mrb[0].mxu0
          %428 = vdwg.mxu0
          %430 = vset.pattern.permute.xlu0 0
          %431 = vperm.xlu0 %430, %v318
          %v432 = vpop.permute.xlu0 %431
          %435 = vset.pattern.permute.xlu0 0
          %436 = vperm.xlu0 %435, %v319
          %v437 = vpop.permute.xlu0 %436
          %v439 = vlaneseq
          %v440 = vshrl.u32 %v439, 7
          %v441 = vsub.s32 0, %v440
          %v442 = vrot.slane %v338, %v441
          %v443 = vadd.f32 %v432, %v442
          %v444 = vadd.f32 %v437, %v442
          %v445 = vmul.f32 %v421, 2.0
          %v446 = vmul.f32 %v426, 2.0
          %v447 = vsub.f32 %v443, %v445
          %v448 = vsub.f32 %v444, %v446
          %v449 = vmax.f32 %v447, 0.0
          %v450 = vmax.f32 %v448, 0.0
          %s451 = smul.f32 %s313, 0.5
          %v452 = vstv %s451
          %v453 = vmul.f32 %v449, %v452
          %v454 = vmul.f32 %v450, %v452
          %v455 = vmax.f32 %v453, -10000.0
          %v456 = vmax.f32 %v454, -10000.0
          %v457 = vmul.f32 %v455, 1.442695
          %v458 = vpow.pop %v457
          %v459 = vmul.f32 %v456, 1.442695
          %v460 = vpow.pop %v459
          %v461 = vmul.f32 %v458, %v458
          %v462 = vmul.f32 %v460, %v460
          %v463 = vadd.f32 %v458, %v461
          %v464 = vadd.f32 %v460, %v462
          %v465 = vmul.f32 %v461, %v461
          %v466 = vmul.f32 %v462, %v462
          %v467 = vadd.f32 %v463, %v465
          %v468 = vadd.f32 %v464, %v466
          %p469 = scmp.lt.s32.totalorder %s24, 1
          %p470 = scmp.lt.s32.totalorder %s25, 1
          %p471 = pneg %p469
          %p472 = pneg %p470
          %p473 = pnand %p469, %p472
          %p474 = pneg %p473
          %p475 = pnand %p471, %p470
          %p476 = pneg %p475
          %p477 = por %p474, %p476
          %s478 = scalar_select %p477, -0.015625, 0.017857144
          %vm479 = vcmask 130048
          %v480 = vsel %vm479, %v467, 0.0
          %v481 = vsel %vm479, %v468, 0.0
          %v482 = vadd.f32 %v480, %v481
          %483 = vadd.xlane.f32.xlu0 %v482
          %v484 = vpop.xlane.xlu0 %483
          %v485 = vrot.slane %v484, 4
          %v486 = vadd.f32 %v484, %v485
          %v487 = vrot.slane %v486, 2
          %v488 = vadd.f32 %v486, %v487
          %v489 = vrot.slane %v488, 1
          %v490 = vadd.f32 %v488, %v489
          %s491 = vtos %v490
          %s492 = smul.f32 %s478, %s491
          %p493 = scmp.gt.s32.totalorder %s25, %s24
          %s494 = scalar_select %p493, 2.0, 1.0
          %v495 = vld [vmem:[%s279] sm:$0xff]
          %s496 = smul.f32 %s494, %s492
          %v497 = vstv %s496
          %v498 = vadd.f32 %v495, %v497
          %499 = vst [vmem:[%s279] sm:$0xff] %v498
        $region48: #{tpu_custom_call.1} parent=39 // pred_fallthru
          _
        %s500 = sand.u32 %s165, 1
        %s501 = scalar_lea.sflag [#allocation4], %s500
        %s502 = sand.u32 %s165, 1
        %s503 = smul.addr %s502, 8
        %s504 = scalar_lea.vmem [#allocation3], %s503
        // Predicated region
        $region49: #{tpu_custom_call.1} parent=39 // pred_check
          %p505 = pneg %p175
        $region50: #{tpu_custom_call.1} parent=39 // pred_check_branch
          %507 = sbr.rel (%p505) target = $region52
        $region51: #{tpu_custom_call.1} parent=39 // pred_region
          %s509 = ssub.s32 128, 128
          %510 = vsyncadd %s501, %s509
          %s511 = smul.addr %s24, 128
          %s512 = scalar_lea.hbm %s5, %s511
          %s514 = sshll.u32 %s504, 4
          %s515 = int_to_ptr.vmem [resolvable:$true] %s514
          %517 = dma.vmem_to_hbm [thread:$0]  %s515, 128, %s512, %s501
        $region52: #{tpu_custom_call.1} parent=39 // pred_fallthru
          _
      $region40: #{tpu_custom_call.1} parent=5 // pred_fallthru
        _
      %p518 = scmp.le.s32.totalorder 2, %s15
      // Predicated region
      $region53: #{tpu_custom_call.1} parent=5 // pred_check
        %p519 = pneg %p518
      $region54: #{tpu_custom_call.1} parent=5 // pred_check_branch
        %521 = sbr.rel (%p519) target = $region56
      $region55: #{tpu_custom_call.1} parent=5 // pred_region
        %s522 = ssub.s32 %s15, 2
        // Predicated region
        $region57: #{tpu_custom_call.1} parent=55 // pred_check
          %p523 = pneg %p181
        $region58: #{tpu_custom_call.1} parent=55 // pred_check_branch
          %525 = sbr.rel (%p523) target = $region60
        $region59: #{tpu_custom_call.1} parent=55 // pred_region
          %s526 = sand.u32 %s166, 1
          %s527 = scalar_lea.sflag [#allocation4], %s526
          %s528 = sand.u32 %s166, 1
          %s529 = smul.addr %s528, 8
          %s530 = scalar_lea.vmem [#allocation3], %s529
          %531 = dma.done %s527, 128
        $region60: #{tpu_custom_call.1} parent=55 // pred_fallthru
          _
      $region56: #{tpu_custom_call.1} parent=5 // pred_fallthru
        _
    $region6: #{tpu_custom_call.1} parent=1 // loop_footer
      %s19 = sadd.s32 1, %s15
    $region7: #{tpu_custom_call.1} parent=1 // loop_footer_branch
      %14 = sbr.rel target = $region3
    $region8: #{tpu_custom_call.1} parent=1 // loop_exit
      _
    %532 = vsyncpa [#allocation4], 1
    %s533 = scalar_lea.sflag [#allocation4], 1
    %534 = vsyncpa %s533, 1

</llo_original>
